<compile_context>
chip_gen: v6e
topology: v6e:2x2x1
jax: 0.10.0
libtpu: 0.0.40
codegen_flags: <defaults>
</compile_context>

<pallas_src>
import functools
from itertools import combinations

import numpy as np
import jax
import jax.numpy as jnp
from jax.experimental import pallas as pl
from jax.experimental.pallas import tpu as pltpu


# ----------------------------------------------------------------------------
# Pallas kernel: one batch tile (TB elements) per grid step.
# ----------------------------------------------------------------------------
def _attn_tgnn_kernel(x_ref,      # VMEM (TB, N, P*F)      bf16, cols = (period, feature)
                      a_ref,      # VMEM (N, N)            bf16, gcn-normalized adjacency
                      w_ref,      # VMEM (P*F, 2*P*H)      bf16, [kron(I,Wz) | kron(I,Wh)]
                      b_ref,      # VMEM (1, 2*P*H)        f32,  folded biases [bz*P | bh*P]
                      sel_ref,    # VMEM (P*H, H)          f32,  kron(softmax(attn), I_H)
                      wout_ref,   # VMEM (H, P)            f32,  output Linear weight
                      bout_ref,   # VMEM (1, P)            f32
                      out_ref,    # VMEM (TB, P)           f32,  node-mean pooled output
                      *, num_nodes, periods, hidden, batch_tile):
    N, P, H, TB = num_nodes, periods, hidden, batch_tile
    PH = P * H
    PF = x_ref.shape[2]

    x = x_ref[...]                                                      # (TB, N, P*F) bf16

    # (1) One feature matmul for all batch elements, periods and both gates.
    g = jnp.dot(x.reshape(TB * N, PF), w_ref[...],
                preferred_element_type=jnp.float32)                     # (TB*N, 2*P*H)
    g = g.astype(jnp.bfloat16).reshape(TB, N, 2 * PH)

    # (2) Graph aggregation: batched over the batch tile only, rhs is 2*P*H lanes wide,
    #     A_hat stays dense (N, N) -- no block-diagonal zeros on the MXU.
    a_b = jnp.broadcast_to(a_ref[...][None, :, :], (TB, N, N))
    pre = jnp.einsum("bnm,bmq->bnq", a_b, g,
                     preferred_element_type=jnp.float32) + b_ref[...]   # (TB, N, 2*P*H) f32

    # (3) Gates (EUP transcendentals are the binding unit after the matmul diet).
    z = jax.nn.sigmoid(pre[:, :, :PH])                                  # update gate, all periods
    h_tilde = jnp.tanh(pre[:, :, PH:])                                  # candidate, all periods
    w = (1.0 - z) * h_tilde                                             # H_t = (1 - Z_t) * H~_t

    # (4) Attention-weighted sum over periods as ONE selector matmul (absorbs softmax probs;
    #     replaces the old serial slice-and-add loop over periods).
    h_acc = jnp.dot(w.reshape(TB * N, PH), sel_ref[...],
                    preferred_element_type=jnp.float32)                 # (TB*N, H)

    # (5) ReLU, mean-pool over nodes (exact: Linear is affine), output Linear.
    h_relu = jnp.maximum(h_acc, 0.0).reshape(TB, N, H)
    pooled = jnp.mean(h_relu, axis=1)                                   # (TB, H)
    out_ref[...] = jnp.dot(pooled, wout_ref[...],
                           preferred_element_type=jnp.float32) + bout_ref[...]


# ----------------------------------------------------------------------------
# Host-side helpers
# ----------------------------------------------------------------------------
def build_gcn_adjacency(num_nodes):
    """Dense A_hat matching PyG GCNConv (add_self_loops=True, improved=False,
    directed edge_index = combinations(range(num_nodes), 2))."""
    edges = list(combinations(range(num_nodes), 2))
    src = np.array([e[0] for e in edges] + list(range(num_nodes)), dtype=np.int64)
    dst = np.array([e[1] for e in edges] + list(range(num_nodes)), dtype=np.int64)
    w = np.ones(len(src), dtype=np.float32)
    deg = np.zeros(num_nodes, dtype=np.float32)
    np.add.at(deg, dst, w)                                   # in-degree (incl. self loop)
    dis = np.where(deg > 0, deg ** -0.5, 0.0).astype(np.float32)
    norm = dis[src] * w * dis[dst]
    a_hat = np.zeros((num_nodes, num_nodes), dtype=np.float32)
    np.add.at(a_hat, (dst, src), norm)                       # out[dst] += norm * x[src]
    return a_hat


def make_params(key, node_features, hidden_dim, periods):
    """Deterministic synthetic parameters with the same shapes as the PyTorch module."""
    ks = jax.random.split(key, 11)
    init = lambda k, shape: (0.1 * jax.random.normal(k, shape)).astype(jnp.float32)
    params = {
        "conv_z_w":   init(ks[0], (hidden_dim, node_features)),     # GCNConv.lin.weight
        "conv_z_b":   init(ks[1], (hidden_dim,)),                   # GCNConv.bias
        "linear_z_w": init(ks[2], (hidden_dim, 2 * hidden_dim)),    # Linear(2H, H).weight
        "linear_z_b": init(ks[3], (hidden_dim,)),
        "conv_h_w":   init(ks[4], (hidden_dim, node_features)),
        "conv_h_b":   init(ks[5], (hidden_dim,)),
        "linear_h_w": init(ks[6], (hidden_dim, 2 * hidden_dim)),
        "linear_h_b": init(ks[7], (hidden_dim,)),
        "attention":  jax.random.uniform(ks[8], (periods,), dtype=jnp.float32),
        "out_w":      init(ks[9], (periods, hidden_dim)),           # Linear(hidden, periods)
        "out_b":      init(ks[10], (periods,)),
    }
    # conv_r / linear_r exist in TGCN2 but never affect the output when H=None (H*R == 0).
    return params


def _const_spec(shape):
    nd = len(shape)
    return pl.BlockSpec(shape, lambda b, _nd=nd: (0,) * _nd)


@jax.jit
def attn_temporal_gnn(agent_obs, hideout_obs, timestep_obs, a_hat, params):
    agent_obs = agent_obs.astype(jnp.float32)
    hideout_obs = hideout_obs.astype(jnp.float32)
    timestep_obs = timestep_obs.astype(jnp.float32)

    B, S, N, F = agent_obs.shape
    H = params["conv_z_w"].shape[0]
    P = params["attention"].shape[0]
    assert S == P, "seq_len must equal periods (as the PyTorch module assumes)"

    # ---- exact host-side (XLA) weight fusion / folding ----
    probs = jax.nn.softmax(params["attention"], axis=0)                  # A3TGCN2 attention
    wz = params["conv_z_w"].T @ params["linear_z_w"][:, :H].T            # (F, H)
    wh = params["conv_h_w"].T @ params["linear_h_w"][:, :H].T            # (F, H)
    bz = params["conv_z_b"][None, :] @ params["linear_z_w"][:, :H].T + params["linear_z_b"][None, :]
    bh = params["conv_h_b"][None, :] @ params["linear_h_w"][:, :H].T + params["linear_h_b"][None, :]

    eye_p = jnp.eye(P, dtype=jnp.float32)
    # Period-stacked gate weights, columns grouped [z for p=0..P-1 | h for p=0..P-1].
    # K = P*F = 32 still fits one MXU pass, and it buys a P*2H-wide rhs for the adjacency matmul.
    w_big = jnp.concatenate([jnp.kron(eye_p, wz), jnp.kron(eye_p, wh)], axis=1)    # (P*F, 2*P*H)
    b_big = jnp.concatenate([jnp.tile(bz, (1, P)), jnp.tile(bh, (1, P))], axis=1)  # (1, 2*P*H)
    # Attention-weighted period sum as a selector matmul (absorbs softmax probs).
    sel = jnp.kron(probs[:, None], jnp.eye(H, dtype=jnp.float32))                  # (P*H, H)
    wout = params["out_w"].T                                                       # (H, P)
    bout = params["out_b"][None, :]                                                # (1, P)

    # x layout (B, N, P*F): rows = node, cols = (period, feature) -- matches w_big's rows.
    x2 = agent_obs.transpose(0, 2, 1, 3).reshape(B, N, P * F)

    # Batch tiling: TB elements per grid step. TB=16 keeps per-step VMEM well under the
    # default scoped limit on v5e/v6e/v7x even at N=83; raise to 32 (v7x) / 64+ (v5e/v6e,
    # with vmem_limit_bytes) for large real batches, keeping >=2 grid steps for v7x's 2 TCs.
    TB = min(B, 16)
    n_blk = -(-B // TB)
    b_pad = n_blk * TB
    if b_pad != B:
        x2 = jnp.pad(x2, ((0, b_pad - B), (0, 0), (0, 0)))

    # bf16 MXU operands, f32 accumulation; elementwise math stays f32.
    x_bf = x2.astype(jnp.bfloat16)
    a_bf = a_hat.astype(jnp.bfloat16)
    w_bf = w_big.astype(jnp.bfloat16)

    kernel = functools.partial(_attn_tgnn_kernel, num_nodes=N, periods=P,
                               hidden=H, batch_tile=TB)
    pooled = pl.pallas_call(
        kernel,
        out_shape=jax.ShapeDtypeStruct((b_pad, P), jnp.float32),
        grid_spec=pltpu.PrefetchScalarGridSpec(
            num_scalar_prefetch=0,
            grid=(n_blk,),
            in_specs=[
                pl.BlockSpec((TB, N, P * F), lambda b: (b, 0, 0)),   # agent_obs tile
                _const_spec((N, N)),                                 # A_hat (dense, no kron)
                _const_spec((P * F, 2 * P * H)),                     # fused gate weights
                _const_spec((1, 2 * P * H)),                         # folded biases
                _const_spec((P * H, H)),                             # attention selector
                _const_spec((H, P)),                                 # output Linear weight
                _const_spec((1, P)),                                 # output Linear bias
            ],
            out_specs=pl.BlockSpec((TB, P), lambda b: (b, 0)),
        ),
        compiler_params=pltpu.CompilerParams(dimension_semantics=("parallel",)),
    )(x_bf, a_bf, w_bf, b_big, sel, wout, bout)

    pooled = pooled[:B]                                               # global_mean_pool result
    # res = torch.cat((h, hideout_obs, timestep_obs), dim=-1)
    return jnp.concatenate([pooled, hideout_obs, timestep_obs], axis=-1)


# ----------------------------------------------------------------------------
# Pure-JAX f32 reference (un-fused, mirrors the PyTorch module with H=None each period)
# ----------------------------------------------------------------------------
def reference_forward(agent_obs, hideout_obs, timestep_obs, a_hat, params):
    agent_obs = agent_obs.astype(jnp.float32)
    B, S, N, F = agent_obs.shape
    H = params["conv_z_w"].shape[0]
    probs = jax.nn.softmax(params["attention"], axis=0)

    def gcn(x_t, w, b):                                   # GCNConv: A_hat @ (x @ W^T) + b
        return jnp.einsum("nm,bmh->bnh", a_hat, x_t @ w.T) + b

    h_accum = jnp.zeros((B, N, H), jnp.float32)
    for p in range(S):
        x_t = agent_obs[:, p]                             # (B, N, F)
        cz = gcn(x_t, params["conv_z_w"], params["conv_z_b"])
        ch = gcn(x_t, params["conv_h_w"], params["conv_h_b"])
        zeros_h = jnp.zeros_like(cz)                      # hidden state is None -> zeros
        z = jax.nn.sigmoid(jnp.concatenate([cz, zeros_h], -1) @ params["linear_z_w"].T
                           + params["linear_z_b"])
        h_tilde = jnp.tanh(jnp.concatenate([ch, zeros_h], -1) @ params["linear_h_w"].T
                           + params["linear_h_b"])
        h_accum = h_accum + probs[p] * ((1.0 - z) * h_tilde)   # H = Z*0 + (1-Z)*H~
    h = jax.nn.relu(h_accum)                              # (B, N, H)
    y = h @ params["out_w"].T + params["out_b"]           # (B, N, P)
    pooled = jnp.mean(y, axis=1)                          # global_mean_pool over nodes
    return jnp.concatenate([pooled, hideout_obs.astype(jnp.float32),
                            timestep_obs.astype(jnp.float32)], axis=-1)


# ----------------------------------------------------------------------------
if __name__ == "__main__":
    key = jax.random.PRNGKey(0)
    # small shapes: batch=2, seq(=periods)=8, num_agents(nodes)=8, node_features=4, hidden=32
    B, S, N, F = 2, 8, 8, 4
    HIDDEN = 32
    HIDEOUT_DIM, TSTEP_DIM = 3, 1

    k_agent, k_hide, k_time, k_params = jax.random.split(key, 4)
    agent_obs = jax.random.normal(k_agent, (B, S, N, F), dtype=jnp.float32)
    hideout_obs = jax.random.normal(k_hide, (B, HIDEOUT_DIM), dtype=jnp.float32)
    timestep_obs = jax.random.uniform(k_time, (B, TSTEP_DIM), dtype=jnp.float32)
    # num_agents element of the input tuple is unused in the PyTorch forward (shape-derived)

    params = make_params(k_params, node_features=F, hidden_dim=HIDDEN, periods=S)
    a_hat = jnp.asarray(build_gcn_adjacency(N))           # dense normalized adjacency

    res = attn_temporal_gnn(agent_obs, hideout_obs, timestep_obs, a_hat, params)
    jax.block_until_ready(res)
    assert res.shape == (B, S + HIDEOUT_DIM + TSTEP_DIM), res.shape
    assert res.dtype == jnp.float32

    ref = reference_forward(agent_obs, hideout_obs, timestep_obs, a_hat, params)
    err = float(jnp.max(jnp.abs(res - ref)))
    assert err < 5e-2, f"max abs error vs reference: {err}"   # bf16 matmuls, f32 accumulation
    print("KERNEL_OK")
</pallas_src>

<mosaic_0001>
module attributes {stable_mosaic.version = 11 : i64} {
  func.func @_attn_tgnn_kernel(%arg0: i32, %arg1: memref<2x8x32xbf16, #tpu.memory_space<vmem>>, %arg2: memref<8x8xbf16, #tpu.memory_space<vmem>>, %arg3: memref<32x512xbf16, #tpu.memory_space<vmem>>, %arg4: memref<1x512xf32, #tpu.memory_space<vmem>>, %arg5: memref<256x32xf32, #tpu.memory_space<vmem>>, %arg6: memref<32x8xf32, #tpu.memory_space<vmem>>, %arg7: memref<1x8xf32, #tpu.memory_space<vmem>>, %arg8: memref<2x8xf32, #tpu.memory_space<vmem>>) attributes {dimension_semantics = [#tpu.dimension_semantics<parallel>], iteration_bounds = array<i64: 1>, scalar_prefetch = 0 : i64, scratch_operands = 0 : i64, tpu.core_type = #tpu.core_type<tc>, window_params = [{transform_indices = @transform_0, window_bounds = array<i64: 2, 8, 32>}, {pipeline_mode = #tpu.pipeline_mode<synchronous>, transform_indices = @transform_1, window_bounds = array<i64: 8, 8>}, {pipeline_mode = #tpu.pipeline_mode<synchronous>, transform_indices = @transform_2, window_bounds = array<i64: 32, 512>}, {pipeline_mode = #tpu.pipeline_mode<synchronous>, transform_indices = @transform_3, window_bounds = array<i64: 1, 512>}, {pipeline_mode = #tpu.pipeline_mode<synchronous>, transform_indices = @transform_4, window_bounds = array<i64: 256, 32>}, {pipeline_mode = #tpu.pipeline_mode<synchronous>, transform_indices = @transform_5, window_bounds = array<i64: 32, 8>}, {pipeline_mode = #tpu.pipeline_mode<synchronous>, transform_indices = @transform_6, window_bounds = array<i64: 1, 8>}, {transform_indices = @transform_7, window_bounds = array<i64: 2, 8>}]} {
    %c0 = arith.constant 0 : index
    %c0_0 = arith.constant 0 : index
    %c0_1 = arith.constant 0 : index
    %0 = vector.load %arg1[%c0, %c0_0, %c0_1] : memref<2x8x32xbf16, #tpu.memory_space<vmem>>, vector<2x8x32xbf16>
    %1 = vector.shape_cast %0 : vector<2x8x32xbf16> to vector<16x32xbf16>
    %c0_2 = arith.constant 0 : index
    %c0_3 = arith.constant 0 : index
    %2 = vector.load %arg3[%c0_2, %c0_3] : memref<32x512xbf16, #tpu.memory_space<vmem>>, vector<32x512xbf16>
    %cst = arith.constant dense<0.000000e+00> : vector<16x512xf32>
    %3 = tpu.matmul %1, %2, %cst {dimension_numbers = #tpu.dot_dimension_numbers<[1], [0], [0], [1], [0, 0, 1, 1], [], []>} : vector<16x32xbf16>, vector<32x512xbf16>, vector<16x512xf32> -> vector<16x512xf32>
    %4 = arith.truncf %3 : vector<16x512xf32> to vector<16x512xbf16>
    %5 = vector.shape_cast %4 : vector<16x512xbf16> to vector<2x8x512xbf16>
    %c0_4 = arith.constant 0 : index
    %c0_5 = arith.constant 0 : index
    %6 = vector.load %arg2[%c0_4, %c0_5] : memref<8x8xbf16, #tpu.memory_space<vmem>>, vector<8x8xbf16>
    %7 = vector.shape_cast %6 : vector<8x8xbf16> to vector<1x8x8xbf16>
    %8 = vector.shape_cast %7 : vector<1x8x8xbf16> to vector<1x8x8xbf16>
    %9 = vector.broadcast %8 : vector<1x8x8xbf16> to vector<2x8x8xbf16>
    "tpu.trace_start"() <{level = 10 : i32, message = "bnm,bmq->bnq"}> : () -> ()
    %cst_6 = arith.constant dense<0.000000e+00> : vector<2x8x512xf32>
    %10 = tpu.matmul %9, %5, %cst_6 {dimension_numbers = #tpu.dot_dimension_numbers<[2], [1], [1], [2], [0, 0, 0, 1, 1, 2], [0], [0]>} : vector<2x8x8xbf16>, vector<2x8x512xbf16>, vector<2x8x512xf32> -> vector<2x8x512xf32>
    "tpu.trace_stop"() : () -> ()
    %c0_7 = arith.constant 0 : index
    %c0_8 = arith.constant 0 : index
    %11 = vector.load %arg4[%c0_7, %c0_8] : memref<1x512xf32, #tpu.memory_space<vmem>>, vector<1x512xf32>
    %12 = vector.shape_cast %11 : vector<1x512xf32> to vector<1x1x512xf32>
    %13 = vector.broadcast %12 : vector<1x1x512xf32> to vector<2x8x512xf32>
    %14 = arith.addf %10, %13 : vector<2x8x512xf32>
    %15 = vector.extract_strided_slice %14 {offsets = [0, 0, 0], sizes = [2, 8, 256], strides = [1, 1, 1]} : vector<2x8x512xf32> to vector<2x8x256xf32>
    %16 = arith.negf %15 : vector<2x8x256xf32>
    %17 = math.exp %16 : vector<2x8x256xf32>
    %cst_9 = arith.constant 1.000000e+00 : f32
    %18 = vector.broadcast %cst_9 : f32 to vector<2x8x256xf32>
    %19 = arith.addf %18, %17 : vector<2x8x256xf32>
    %20 = arith.divf %18, %19 : vector<2x8x256xf32>
    %21 = vector.extract_strided_slice %14 {offsets = [0, 0, 256], sizes = [2, 8, 256], strides = [1, 1, 1]} : vector<2x8x512xf32> to vector<2x8x256xf32>
    %22 = math.tanh %21 : vector<2x8x256xf32>
    %cst_10 = arith.constant 1.000000e+00 : f32
    %23 = vector.broadcast %cst_10 : f32 to vector<2x8x256xf32>
    %24 = arith.subf %23, %20 : vector<2x8x256xf32>
    %25 = arith.mulf %24, %22 : vector<2x8x256xf32>
    %26 = vector.shape_cast %25 : vector<2x8x256xf32> to vector<16x256xf32>
    %c0_11 = arith.constant 0 : index
    %c0_12 = arith.constant 0 : index
    %27 = vector.load %arg5[%c0_11, %c0_12] : memref<256x32xf32, #tpu.memory_space<vmem>>, vector<256x32xf32>
    %cst_13 = arith.constant dense<0.000000e+00> : vector<16x32xf32>
    %28 = tpu.matmul %26, %27, %cst_13 {dimension_numbers = #tpu.dot_dimension_numbers<[1], [0], [0], [1], [0, 0, 1, 1], [], []>} : vector<16x256xf32>, vector<256x32xf32>, vector<16x32xf32> -> vector<16x32xf32>
    %cst_14 = arith.constant 0.000000e+00 : f32
    %29 = vector.broadcast %cst_14 : f32 to vector<16x32xf32>
    %30 = arith.maximumf %28, %29 : vector<16x32xf32>
    %31 = vector.shape_cast %30 : vector<16x32xf32> to vector<2x8x32xf32>
    %cst_15 = arith.constant dense<0.000000e+00> : vector<2x32xf32>
    %32 = vector.multi_reduction <add>, %31, %cst_15 [1] : vector<2x8x32xf32> to vector<2x32xf32>
    %cst_16 = arith.constant 8.000000e+00 : f32
    %33 = vector.broadcast %cst_16 : f32 to vector<2x32xf32>
    %34 = arith.divf %32, %33 : vector<2x32xf32>
    %c0_17 = arith.constant 0 : index
    %c0_18 = arith.constant 0 : index
    %35 = vector.load %arg6[%c0_17, %c0_18] : memref<32x8xf32, #tpu.memory_space<vmem>>, vector<32x8xf32>
    %cst_19 = arith.constant dense<0.000000e+00> : vector<2x8xf32>
    %36 = tpu.matmul %34, %35, %cst_19 {dimension_numbers = #tpu.dot_dimension_numbers<[1], [0], [0], [1], [0, 0, 1, 1], [], []>} : vector<2x32xf32>, vector<32x8xf32>, vector<2x8xf32> -> vector<2x8xf32>
    %c0_20 = arith.constant 0 : index
    %c0_21 = arith.constant 0 : index
    %37 = vector.load %arg7[%c0_20, %c0_21] : memref<1x8xf32, #tpu.memory_space<vmem>>, vector<1x8xf32>
    %38 = vector.broadcast %37 : vector<1x8xf32> to vector<2x8xf32>
    %39 = arith.addf %36, %38 : vector<2x8xf32>
    %c0_22 = arith.constant 0 : index
    %c0_23 = arith.constant 0 : index
    %40 = vector.load %arg8[%c0_22, %c0_23] : memref<2x8xf32, #tpu.memory_space<vmem>>, vector<2x8xf32>
    tpu.vector_store %arg8[%c0_22, %c0_23], %39 {strides = array<i32>} : memref<2x8xf32, #tpu.memory_space<vmem>>, vector<2x8xf32>,
    return
  }
  func.func @transform_0(%arg0: i32) -> (i32, i32, i32) {
    %c0_i32 = arith.constant 0 : i32
    %c0_i32_0 = arith.constant 0 : i32
    %c0_i32_1 = arith.constant 0 : i32
    return %arg0, %c0_i32, %c0_i32_0 : i32, i32, i32
  }
  func.func @transform_1(%arg0: i32) -> (i32, i32) {
    %c0_i32 = arith.constant 0 : i32
    %c0_i32_0 = arith.constant 0 : i32
    %c0_i32_1 = arith.constant 0 : i32
    return %c0_i32, %c0_i32_0 : i32, i32
  }
  func.func @transform_2(%arg0: i32) -> (i32, i32) {
    %c0_i32 = arith.constant 0 : i32
    %c0_i32_0 = arith.constant 0 : i32
    %c0_i32_1 = arith.constant 0 : i32
    return %c0_i32, %c0_i32_0 : i32, i32
  }
  func.func @transform_3(%arg0: i32) -> (i32, i32) {
    %c0_i32 = arith.constant 0 : i32
    %c0_i32_0 = arith.constant 0 : i32
    %c0_i32_1 = arith.constant 0 : i32
    return %c0_i32, %c0_i32_0 : i32, i32
  }
  func.func @transform_4(%arg0: i32) -> (i32, i32) {
    %c0_i32 = arith.constant 0 : i32
    %c0_i32_0 = arith.constant 0 : i32
    %c0_i32_1 = arith.constant 0 : i32
    return %c0_i32, %c0_i32_0 : i32, i32
  }
  func.func @transform_5(%arg0: i32) -> (i32, i32) {
    %c0_i32 = arith.constant 0 : i32
    %c0_i32_0 = arith.constant 0 : i32
    %c0_i32_1 = arith.constant 0 : i32
    return %c0_i32, %c0_i32_0 : i32, i32
  }
  func.func @transform_6(%arg0: i32) -> (i32, i32) {
    %c0_i32 = arith.constant 0 : i32
    %c0_i32_0 = arith.constant 0 : i32
    %c0_i32_1 = arith.constant 0 : i32
    return %c0_i32, %c0_i32_0 : i32, i32
  }
  func.func @transform_7(%arg0: i32) -> (i32, i32) {
    %c0_i32 = arith.constant 0 : i32
    %c0_i32_0 = arith.constant 0 : i32
    return %arg0, %c0_i32 : i32, i32
  }
}

</mosaic_0001>

<llo_original>
// kernel: attn_temporal_gnn.1
$region0: #{attn_temporal_gnn.1}
  #allocation0 [shape = 'u32[]', space=smem, size = 0x4, offset = 0x4, fixed_abs, tag = 'smem constant byte address 0x4 - core index']
  #allocation1 [shape = 'u32[144,128]{1,0:T(1,128)}', space=vmem, size = 0x12000, scoped, tag = 'internal scratch']
  %s0 = inlined_call_operand.vmem [shape: bf16[2,8,32], index: 0, kind: input, shape index: {}]
  %s1 = inlined_call_operand.vmem [shape: bf16[8,8], index: 1, kind: input, shape index: {}]
  %s2 = inlined_call_operand.vmem [shape: bf16[32,512], index: 2, kind: input, shape index: {}]
  %s3 = inlined_call_operand.vmem [shape: f32[1,512], index: 3, kind: input, shape index: {}]
  %s4 = inlined_call_operand.vmem [shape: f32[256,32], index: 4, kind: input, shape index: {}]
  %s5 = inlined_call_operand.vmem [shape: f32[32,8], index: 5, kind: input, shape index: {}]
  %s6 = inlined_call_operand.vmem [shape: f32[1,8], index: 6, kind: input, shape index: {}]
  %s7 = inlined_call_operand.vmem [shape: f32[2,8], index: 7, kind: output, shape index: {}]
  %s8 = sld [smem:[#allocation0]]
  $region38: #{attn_temporal_gnn.1} parent=0
    _
  %s10 = ssub.s32 1, %s8
  %s11 = scalar_select 0, %s10, %s8
  // Predicated region
  $region2: #{attn_temporal_gnn.1} parent=0 // pred_check
    _
  $region3: #{attn_temporal_gnn.1} parent=0 // pred_check_branch
    %13 = sbr.rel (0) target = $region5
  $region4: #{attn_temporal_gnn.1} parent=0 // pred_region
    _
  $region5: #{attn_temporal_gnn.1} parent=0 // pred_fallthru
    _
  // Predicated region
  $region6: #{attn_temporal_gnn.1} parent=0 // pred_check
    _
  $region7: #{attn_temporal_gnn.1} parent=0 // pred_check_branch
    %15 = sbr.rel (0) target = $region9
  $region8: #{attn_temporal_gnn.1} parent=0 // pred_region
    _
  $region9: #{attn_temporal_gnn.1} parent=0 // pred_fallthru
    _
  // Predicated region
  $region10: #{attn_temporal_gnn.1} parent=0 // pred_check
    _
  $region11: #{attn_temporal_gnn.1} parent=0 // pred_check_branch
    %17 = sbr.rel (0) target = $region13
  $region12: #{attn_temporal_gnn.1} parent=0 // pred_region
    _
  $region13: #{attn_temporal_gnn.1} parent=0 // pred_fallthru
    _
  // Predicated region
  $region14: #{attn_temporal_gnn.1} parent=0 // pred_check
    _
  $region15: #{attn_temporal_gnn.1} parent=0 // pred_check_branch
    %19 = sbr.rel (0) target = $region17
  $region16: #{attn_temporal_gnn.1} parent=0 // pred_region
    _
  $region17: #{attn_temporal_gnn.1} parent=0 // pred_fallthru
    _
  // Predicated region
  $region18: #{attn_temporal_gnn.1} parent=0 // pred_check
    _
  $region19: #{attn_temporal_gnn.1} parent=0 // pred_check_branch
    %21 = sbr.rel (0) target = $region21
  $region20: #{attn_temporal_gnn.1} parent=0 // pred_region
    _
  $region21: #{attn_temporal_gnn.1} parent=0 // pred_fallthru
    _
  // Predicated region
  $region22: #{attn_temporal_gnn.1} parent=0 // pred_check
    _
  $region23: #{attn_temporal_gnn.1} parent=0 // pred_check_branch
    %23 = sbr.rel (0) target = $region25
  $region24: #{attn_temporal_gnn.1} parent=0 // pred_region
    _
  $region25: #{attn_temporal_gnn.1} parent=0 // pred_fallthru
    _
  // Predicated region
  $region26: #{attn_temporal_gnn.1} parent=0 // pred_check
    _
  $region27: #{attn_temporal_gnn.1} parent=0 // pred_check_branch
    %25 = sbr.rel (0) target = $region29
  $region28: #{attn_temporal_gnn.1} parent=0 // pred_region
    _
  $region29: #{attn_temporal_gnn.1} parent=0 // pred_fallthru
    _
  %v27 = vld [vmem:[%s0] sm:$0xf]
  %v28 = vld [vmem:[%s0 + $0x4] sm:$0xf]
  %v29 = vld [vmem:[%s2] sm:$0xff]
  %v30 = vld [vmem:[%s2 + $0x8] sm:$0xff]
  %v31 = vld [vmem:[%s2 + $0x10] sm:$0xff]
  %v32 = vld [vmem:[%s2 + $0x18] sm:$0xff]
  %v33 = vld [vmem:[%s2 + $0x20] sm:$0xff]
  %v34 = vld [vmem:[%s2 + $0x28] sm:$0xff]
  %v35 = vld [vmem:[%s2 + $0x30] sm:$0xff]
  %v36 = vld [vmem:[%s2 + $0x38] sm:$0xff]
  %v39 = vunpack.c.l.b16 %v27
  %v40 = vunpack.c.l.b16 %v28
  %v41 = vpack.c.b16 %v40, %v39
  %v50 = vunpack.c.l.b16 %v29
  %v51 = vunpack.c.h.b16 %v29
  %v52 = vunpack.c.l.b16 %v30
  %v53 = vunpack.c.h.b16 %v30
  %v54 = vunpack.c.l.b16 %v31
  %v55 = vunpack.c.h.b16 %v31
  %v56 = vunpack.c.l.b16 %v32
  %v57 = vunpack.c.h.b16 %v32
  %v58 = vunpack.c.l.b16 %v33
  %v59 = vunpack.c.h.b16 %v33
  %v60 = vunpack.c.l.b16 %v34
  %v61 = vunpack.c.h.b16 %v34
  %v62 = vunpack.c.l.b16 %v35
  %v63 = vunpack.c.h.b16 %v35
  %v64 = vunpack.c.l.b16 %v36
  %v65 = vunpack.c.h.b16 %v36
  %v66 = vpack.c.b16 %v54, %v50
  %v67 = vpack.c.b16 %v55, %v51
  %v68 = vpack.c.b16 %v56, %v52
  %v69 = vpack.c.b16 %v57, %v53
  %v70 = vpack.c.b16 %v62, %v58
  %v71 = vpack.c.b16 %v63, %v59
  %v72 = vpack.c.b16 %v64, %v60
  %v73 = vpack.c.b16 %v65, %v61
  %vm82 = vcmask 261120
  %v84 = vsel %vm82, %v41, 0
  %86 = vmatprep.subr.bf16.mxu0 0
  %87 = vmatpush1.bf16.msra.mxu0 0
  %88 = vmatprep.subr.bf16.mxu0 0
  %89 = vmatpush1.bf16.msra.mxu0 0
  %90 = vmatprep.subr.bf16.mxu0 0
  %91 = vmatpush1.bf16.msra.mxu0 0
  %92 = vmatprep.subr.bf16.mxu0 0
  %93 = vmatpush1.bf16.msra.mxu0 0
  %94 = vmatprep.subr.bf16.mxu0 0
  %95 = vmatpush1.bf16.msra.mxu0 0
  %96 = vmatprep.subr.bf16.mxu0 0
  %97 = vmatpush1.bf16.msra.mxu0 0
  %98 = vmatprep.subr.bf16.mxu0 %v71
  %99 = vmatpush1.bf16.msra.mxu0 %v70
  %100 = vmatprep.subr.bf16.mxu0 %v67
  %101 = vmatpush1.bf16.msra.mxu0 %v66
  %102 = vmatprep.subr.bf16.mxu0 0
  %103 = vmatpush2.bf16.msra.mxu0 0
  %104 = vmatprep.subr.bf16.mxu0 0
  %105 = vmatpush2.bf16.msra.mxu0 0
  %106 = vmatprep.subr.bf16.mxu0 0
  %107 = vmatpush2.bf16.msra.mxu0 0
  %108 = vmatprep.subr.bf16.mxu0 0
  %109 = vmatpush2.bf16.msra.mxu0 0
  %110 = vmatprep.subr.bf16.mxu0 0
  %111 = vmatpush2.bf16.msra.mxu0 0
  %112 = vmatprep.subr.bf16.mxu0 0
  %113 = vmatpush2.bf16.msra.mxu0 0
  %114 = vmatprep.subr.bf16.mxu0 0
  %115 = vmatpush2.bf16.msra.mxu0 0
  %116 = vmatprep.subr.bf16.mxu0 0
  %117 = vmatpush2.bf16.msra.mxu0 0
  %118 = vmatprep.mubr.bf16.mxu0 0
  %119 = vmatmul.mubr.bf16.gmra.mxu0 %v84
  %v120 = vpop.f32.mrf.mxu0
  %v121 = vadd.f32 0.0, %v120
  %v122 = vpop.f32.mrf.mxu0
  %v123 = vadd.f32 0.0, %v122
  %v124 = vpop.f32.mrf.mxu0
  %v125 = vadd.f32 0.0, %v124
  %v126 = vpop.f32.mrf.mxu0
  %v127 = vadd.f32 0.0, %v126
  %128 = vdwg.mxu0
  %129 = vmatprep.subr.bf16.mxu0 0
  %130 = vmatpush1.bf16.msra.mxu0 0
  %131 = vmatprep.subr.bf16.mxu0 0
  %132 = vmatpush1.bf16.msra.mxu0 0
  %133 = vmatprep.subr.bf16.mxu0 0
  %134 = vmatpush1.bf16.msra.mxu0 0
  %135 = vmatprep.subr.bf16.mxu0 0
  %136 = vmatpush1.bf16.msra.mxu0 0
  %137 = vmatprep.subr.bf16.mxu0 0
  %138 = vmatpush1.bf16.msra.mxu0 0
  %139 = vmatprep.subr.bf16.mxu0 0
  %140 = vmatpush1.bf16.msra.mxu0 0
  %141 = vmatprep.subr.bf16.mxu0 %v73
  %142 = vmatpush1.bf16.msra.mxu0 %v72
  %143 = vmatprep.subr.bf16.mxu0 %v69
  %144 = vmatpush1.bf16.msra.mxu0 %v68
  %145 = vmatprep.subr.bf16.mxu0 0
  %146 = vmatpush2.bf16.msra.mxu0 0
  %147 = vmatprep.subr.bf16.mxu0 0
  %148 = vmatpush2.bf16.msra.mxu0 0
  %149 = vmatprep.subr.bf16.mxu0 0
  %150 = vmatpush2.bf16.msra.mxu0 0
  %151 = vmatprep.subr.bf16.mxu0 0
  %152 = vmatpush2.bf16.msra.mxu0 0
  %153 = vmatprep.subr.bf16.mxu0 0
  %154 = vmatpush2.bf16.msra.mxu0 0
  %155 = vmatprep.subr.bf16.mxu0 0
  %156 = vmatpush2.bf16.msra.mxu0 0
  %157 = vmatprep.subr.bf16.mxu0 0
  %158 = vmatpush2.bf16.msra.mxu0 0
  %159 = vmatprep.subr.bf16.mxu0 0
  %160 = vmatpush2.bf16.msra.mxu0 0
  %161 = vmatprep.mubr.bf16.mxu0 0
  %162 = vmatmul.mubr.bf16.gmra.mxu0 %v84
  %v163 = vpop.f32.mrf.mxu0
  %v164 = vadd.f32 0.0, %v163
  %v165 = vpop.f32.mrf.mxu0
  %v166 = vadd.f32 0.0, %v165
  %v167 = vpop.f32.mrf.mxu0
  %v168 = vadd.f32 0.0, %v167
  %v169 = vpop.f32.mrf.mxu0
  %v170 = vadd.f32 0.0, %v169
  %171 = vdwg.mxu0
  %v172 = vpack.c.bf16 %v125, %v121
  %v173 = vpack.c.bf16 %v127, %v123
  %v174 = vpack.c.bf16 %v168, %v164
  %v175 = vpack.c.bf16 %v170, %v166
  %v180 = vunpack.c.l.b16 %v172
  %v181 = vunpack.c.l.b16 %v173
  %v182 = vunpack.c.l.b16 %v174
  %v183 = vunpack.c.l.b16 %v175
  %v184 = vunpack.c.h.b16 %v172
  %v185 = vunpack.c.h.b16 %v173
  %v186 = vunpack.c.h.b16 %v174
  %v187 = vunpack.c.h.b16 %v175
  %v188 = vld [vmem:[%s1] sm:$0xf]
  %v189 = vld [vmem:[%s3] sm:$0xf]
  %v191 = vlaneseq
  %v192 = vshrl.u32 %v191, 7
  %v193 = vsub.s32 0, %v192
  %v194 = vrot.slane %v189, %v193
  %v195 = vlaneseq
  %v196 = vshrl.u32 %v195, 7
  %v197 = vsub.s32 1, %v196
  %v198 = vrot.slane %v189, %v197
  %v199 = vlaneseq
  %v200 = vshrl.u32 %v199, 7
  %v201 = vsub.s32 2, %v200
  %v202 = vrot.slane %v189, %v201
  %v203 = vlaneseq
  %v204 = vshrl.u32 %v203, 7
  %v205 = vsub.s32 3, %v204
  %v206 = vrot.slane %v189, %v205
  %v211 = vpack.c.b16 %v180, %v180
  %v212 = vpack.c.b16 %v181, %v181
  %v213 = vpack.c.b16 %v182, %v182
  %v214 = vpack.c.b16 %v183, %v183
  %vm215 = vcmask 64512
  %v217 = vsel %vm215, %v188, 0
  %vm219 = vcmask 1043456
  %v221 = vsel %vm219, %v211, 0
  %v224 = vsel %vm219, %v212, 0
  %v227 = vsel %vm219, %v213, 0
  %v230 = vsel %vm219, %v214, 0
  %232 = vmatprep.subr.bf16.mxu0 0
  %233 = vmatpush1.bf16.msra.mxu0 0
  %234 = vmatprep.subr.bf16.mxu0 0
  %235 = vmatpush1.bf16.msra.mxu0 0
  %236 = vmatprep.subr.bf16.mxu0 0
  %237 = vmatpush1.bf16.msra.mxu0 0
  %238 = vmatprep.subr.bf16.mxu0 0
  %239 = vmatpush1.bf16.msra.mxu0 0
  %240 = vmatprep.subr.bf16.mxu0 0
  %241 = vmatpush1.bf16.msra.mxu0 0
  %242 = vmatprep.subr.bf16.mxu0 0
  %243 = vmatpush1.bf16.msra.mxu0 0
  %244 = vmatprep.subr.bf16.mxu0 0
  %245 = vmatpush1.bf16.msra.mxu0 0
  %246 = vmatprep.subr.bf16.mxu0 %v224
  %247 = vmatpush1.bf16.msra.mxu0 %v221
  %248 = vmatprep.subr.bf16.mxu0 0
  %249 = vmatpush2.bf16.msra.mxu0 0
  %250 = vmatprep.subr.bf16.mxu0 0
  %251 = vmatpush2.bf16.msra.mxu0 0
  %252 = vmatprep.subr.bf16.mxu0 0
  %253 = vmatpush2.bf16.msra.mxu0 0
  %254 = vmatprep.subr.bf16.mxu0 0
  %255 = vmatpush2.bf16.msra.mxu0 0
  %256 = vmatprep.subr.bf16.mxu0 0
  %257 = vmatpush2.bf16.msra.mxu0 0
  %258 = vmatprep.subr.bf16.mxu0 0
  %259 = vmatpush2.bf16.msra.mxu0 0
  %260 = vmatprep.subr.bf16.mxu0 0
  %261 = vmatpush2.bf16.msra.mxu0 0
  %262 = vmatprep.subr.bf16.mxu0 0
  %263 = vmatpush2.bf16.msra.mxu0 0
  %264 = vmatprep.mubr.bf16.mxu0 0
  %265 = vmatmul.mubr.bf16.gmra.mxu0 %v217
  %v266 = vpop.f32.mrf.mxu0
  %v267 = vadd.f32 %v194, %v266
  %v268 = vpop.f32.mrf.mxu0
  %v269 = vadd.f32 %v198, %v268
  %v270 = vpop.f32.mrf.mxu0
  %v271 = vpop.f32.mrf.mxu0
  %272 = vdwg.mxu0
  %273 = vmatprep.subr.bf16.mxu0 0
  %274 = vmatpush1.bf16.msra.mxu0 0
  %275 = vmatprep.subr.bf16.mxu0 0
  %276 = vmatpush1.bf16.msra.mxu0 0
  %277 = vmatprep.subr.bf16.mxu0 0
  %278 = vmatpush1.bf16.msra.mxu0 0
  %279 = vmatprep.subr.bf16.mxu0 0
  %280 = vmatpush1.bf16.msra.mxu0 0
  %281 = vmatprep.subr.bf16.mxu0 0
  %282 = vmatpush1.bf16.msra.mxu0 0
  %283 = vmatprep.subr.bf16.mxu0 0
  %284 = vmatpush1.bf16.msra.mxu0 0
  %285 = vmatprep.subr.bf16.mxu0 0
  %286 = vmatpush1.bf16.msra.mxu0 0
  %287 = vmatprep.subr.bf16.mxu0 %v230
  %288 = vmatpush1.bf16.msra.mxu0 %v227
  %289 = vmatprep.subr.bf16.mxu0 0
  %290 = vmatpush2.bf16.msra.mxu0 0
  %291 = vmatprep.subr.bf16.mxu0 0
  %292 = vmatpush2.bf16.msra.mxu0 0
  %293 = vmatprep.subr.bf16.mxu0 0
  %294 = vmatpush2.bf16.msra.mxu0 0
  %295 = vmatprep.subr.bf16.mxu0 0
  %296 = vmatpush2.bf16.msra.mxu0 0
  %297 = vmatprep.subr.bf16.mxu0 0
  %298 = vmatpush2.bf16.msra.mxu0 0
  %299 = vmatprep.subr.bf16.mxu0 0
  %300 = vmatpush2.bf16.msra.mxu0 0
  %301 = vmatprep.subr.bf16.mxu0 0
  %302 = vmatpush2.bf16.msra.mxu0 0
  %303 = vmatprep.subr.bf16.mxu0 0
  %304 = vmatpush2.bf16.msra.mxu0 0
  %305 = vmatprep.mubr.bf16.mxu0 0
  %306 = vmatmul.mubr.bf16.gmra.mxu0 %v217
  %v307 = vpop.f32.mrf.mxu0
  %v308 = vadd.f32 %v202, %v307
  %v309 = vpop.f32.mrf.mxu0
  %v310 = vadd.f32 %v206, %v309
  %v311 = vpop.f32.mrf.mxu0
  %v312 = vpop.f32.mrf.mxu0
  %313 = vdwg.mxu0
  %v314 = vpack.c.b16 %v184, %v184
  %v315 = vpack.c.b16 %v185, %v185
  %v316 = vpack.c.b16 %v186, %v186
  %v317 = vpack.c.b16 %v187, %v187
  %v319 = vsel %vm219, %v314, 0
  %v322 = vsel %vm219, %v315, 0
  %v325 = vsel %vm219, %v316, 0
  %v328 = vsel %vm219, %v317, 0
  %330 = vmatprep.subr.bf16.mxu0 0
  %331 = vmatpush1.bf16.msra.mxu0 0
  %332 = vmatprep.subr.bf16.mxu0 0
  %333 = vmatpush1.bf16.msra.mxu0 0
  %334 = vmatprep.subr.bf16.mxu0 0
  %335 = vmatpush1.bf16.msra.mxu0 0
  %336 = vmatprep.subr.bf16.mxu0 0
  %337 = vmatpush1.bf16.msra.mxu0 0
  %338 = vmatprep.subr.bf16.mxu0 0
  %339 = vmatpush1.bf16.msra.mxu0 0
  %340 = vmatprep.subr.bf16.mxu0 0
  %341 = vmatpush1.bf16.msra.mxu0 0
  %342 = vmatprep.subr.bf16.mxu0 0
  %343 = vmatpush1.bf16.msra.mxu0 0
  %344 = vmatprep.subr.bf16.mxu0 %v322
  %345 = vmatpush1.bf16.msra.mxu0 %v319
  %346 = vmatprep.subr.bf16.mxu0 0
  %347 = vmatpush2.bf16.msra.mxu0 0
  %348 = vmatprep.subr.bf16.mxu0 0
  %349 = vmatpush2.bf16.msra.mxu0 0
  %350 = vmatprep.subr.bf16.mxu0 0
  %351 = vmatpush2.bf16.msra.mxu0 0
  %352 = vmatprep.subr.bf16.mxu0 0
  %353 = vmatpush2.bf16.msra.mxu0 0
  %354 = vmatprep.subr.bf16.mxu0 0
  %355 = vmatpush2.bf16.msra.mxu0 0
  %356 = vmatprep.subr.bf16.mxu0 0
  %357 = vmatpush2.bf16.msra.mxu0 0
  %358 = vmatprep.subr.bf16.mxu0 0
  %359 = vmatpush2.bf16.msra.mxu0 0
  %360 = vmatprep.subr.bf16.mxu0 0
  %361 = vmatpush2.bf16.msra.mxu0 0
  %362 = vmatprep.mubr.bf16.mxu0 0
  %363 = vmatmul.mubr.bf16.gmra.mxu0 %v217
  %v364 = vpop.f32.mrf.mxu0
  %v365 = vadd.f32 %v194, %v364
  %v366 = vpop.f32.mrf.mxu0
  %v367 = vadd.f32 %v198, %v366
  %v368 = vpop.f32.mrf.mxu0
  %v369 = vpop.f32.mrf.mxu0
  %370 = vdwg.mxu0
  %371 = vmatprep.subr.bf16.mxu0 0
  %372 = vmatpush1.bf16.msra.mxu0 0
  %373 = vmatprep.subr.bf16.mxu0 0
  %374 = vmatpush1.bf16.msra.mxu0 0
  %375 = vmatprep.subr.bf16.mxu0 0
  %376 = vmatpush1.bf16.msra.mxu0 0
  %377 = vmatprep.subr.bf16.mxu0 0
  %378 = vmatpush1.bf16.msra.mxu0 0
  %379 = vmatprep.subr.bf16.mxu0 0
  %380 = vmatpush1.bf16.msra.mxu0 0
  %381 = vmatprep.subr.bf16.mxu0 0
  %382 = vmatpush1.bf16.msra.mxu0 0
  %383 = vmatprep.subr.bf16.mxu0 0
  %384 = vmatpush1.bf16.msra.mxu0 0
  %385 = vmatprep.subr.bf16.mxu0 %v328
  %386 = vmatpush1.bf16.msra.mxu0 %v325
  %387 = vmatprep.subr.bf16.mxu0 0
  %388 = vmatpush2.bf16.msra.mxu0 0
  %389 = vmatprep.subr.bf16.mxu0 0
  %390 = vmatpush2.bf16.msra.mxu0 0
  %391 = vmatprep.subr.bf16.mxu0 0
  %392 = vmatpush2.bf16.msra.mxu0 0
  %393 = vmatprep.subr.bf16.mxu0 0
  %394 = vmatpush2.bf16.msra.mxu0 0
  %395 = vmatprep.subr.bf16.mxu0 0
  %396 = vmatpush2.bf16.msra.mxu0 0
  %397 = vmatprep.subr.bf16.mxu0 0
  %398 = vmatpush2.bf16.msra.mxu0 0
  %399 = vmatprep.subr.bf16.mxu0 0
  %400 = vmatpush2.bf16.msra.mxu0 0
  %401 = vmatprep.subr.bf16.mxu0 0
  %402 = vmatpush2.bf16.msra.mxu0 0
  %403 = vmatprep.mubr.bf16.mxu0 0
  %404 = vmatmul.mubr.bf16.gmra.mxu0 %v217
  %v405 = vpop.f32.mrf.mxu0
  %v406 = vadd.f32 %v202, %v405
  %v407 = vpop.f32.mrf.mxu0
  %v408 = vadd.f32 %v206, %v407
  %v409 = vpop.f32.mrf.mxu0
  %v410 = vpop.f32.mrf.mxu0
  %411 = vdwg.mxu0
  %v412 = vxor.u32 %v267, 2147483648
  %v413 = vxor.u32 %v269, 2147483648
  %v414 = vxor.u32 %v365, 2147483648
  %v415 = vxor.u32 %v367, 2147483648
  %v416 = vmul.f32 %v412, 1.442695
  %v417 = vpow.pop %v416
  %v418 = vmul.f32 %v413, 1.442695
  %v419 = vpow.pop %v418
  %v420 = vmul.f32 %v414, 1.442695
  %v421 = vpow.pop %v420
  %v422 = vmul.f32 %v415, 1.442695
  %v423 = vpow.pop %v422
  %v424 = vadd.f32 %v417, 1.0
  %v425 = vadd.f32 %v419, 1.0
  %v426 = vadd.f32 %v421, 1.0
  %v427 = vadd.f32 %v423, 1.0
  %v428 = vrcp.pop %v424
  %v429 = vmul.f32 1.0, %v428
  %v430 = vrcp.pop %v425
  %v431 = vmul.f32 1.0, %v430
  %v432 = vrcp.pop %v426
  %v433 = vmul.f32 1.0, %v432
  %v434 = vrcp.pop %v427
  %v435 = vmul.f32 1.0, %v434
  %v436 = vtanh.pop %v308
  %v437 = vtanh.pop %v310
  %v438 = vtanh.pop %v406
  %v439 = vtanh.pop %v408
  %v440 = vsub.f32 1.0, %v429
  %v441 = vsub.f32 1.0, %v431
  %v442 = vsub.f32 1.0, %v433
  %v443 = vsub.f32 1.0, %v435
  %v444 = vmul.f32 %v440, %v436
  %v445 = vmul.f32 %v441, %v437
  %v446 = vmul.f32 %v442, %v438
  %v447 = vmul.f32 %v443, %v439
  %v448 = vld [vmem:[%s4] sm:$0xff]
  %v449 = vld [vmem:[%s4 + $0x8] sm:$0xff]
  %v450 = vld [vmem:[%s4 + $0x10] sm:$0xff]
  %v451 = vld [vmem:[%s4 + $0x18] sm:$0xff]
  %v452 = vld [vmem:[%s4 + $0x20] sm:$0xff]
  %v453 = vld [vmem:[%s4 + $0x28] sm:$0xff]
  %v454 = vld [vmem:[%s4 + $0x30] sm:$0xff]
  %v455 = vld [vmem:[%s4 + $0x38] sm:$0xff]
  %v456 = vld [vmem:[%s4 + $0x40] sm:$0xff]
  %v457 = vld [vmem:[%s4 + $0x48] sm:$0xff]
  %v458 = vld [vmem:[%s4 + $0x50] sm:$0xff]
  %v459 = vld [vmem:[%s4 + $0x58] sm:$0xff]
  %v460 = vld [vmem:[%s4 + $0x60] sm:$0xff]
  %v461 = vld [vmem:[%s4 + $0x68] sm:$0xff]
  %v462 = vld [vmem:[%s4 + $0x70] sm:$0xff]
  %v463 = vld [vmem:[%s4 + $0x78] sm:$0xff]
  %v464 = vld [vmem:[%s4 + $0x80] sm:$0xff]
  %v465 = vld [vmem:[%s4 + $0x88] sm:$0xff]
  %v466 = vld [vmem:[%s4 + $0x90] sm:$0xff]
  %v467 = vld [vmem:[%s4 + $0x98] sm:$0xff]
  %v468 = vld [vmem:[%s4 + $0xa0] sm:$0xff]
  %v469 = vld [vmem:[%s4 + $0xa8] sm:$0xff]
  %v470 = vld [vmem:[%s4 + $0xb0] sm:$0xff]
  %v471 = vld [vmem:[%s4 + $0xb8] sm:$0xff]
  %v472 = vld [vmem:[%s4 + $0xc0] sm:$0xff]
  %v473 = vld [vmem:[%s4 + $0xc8] sm:$0xff]
  %v474 = vld [vmem:[%s4 + $0xd0] sm:$0xff]
  %v475 = vld [vmem:[%s4 + $0xd8] sm:$0xff]
  %v476 = vld [vmem:[%s4 + $0xe0] sm:$0xff]
  %v477 = vld [vmem:[%s4 + $0xe8] sm:$0xff]
  %v478 = vld [vmem:[%s4 + $0xf0] sm:$0xff]
  %v479 = vld [vmem:[%s4 + $0xf8] sm:$0xff]
  %480 = vmatprep.subr.mxu0 0.0
  %481 = vmatpush1.msra.mxu0 %v463
  %482 = vmatprep.subr.mxu0 0.0
  %483 = vmatpush1.msra.mxu0 %v462
  %484 = vmatprep.subr.mxu0 0.0
  %485 = vmatpush1.msra.mxu0 %v461
  %486 = vmatprep.subr.mxu0 0.0
  %487 = vmatpush1.msra.mxu0 %v460
  %488 = vmatprep.subr.mxu0 0.0
  %489 = vmatpush1.msra.mxu0 %v459
  %490 = vmatprep.subr.mxu0 0.0
  %491 = vmatpush1.msra.mxu0 %v458
  %492 = vmatprep.subr.mxu0 0.0
  %493 = vmatpush1.msra.mxu0 %v457
  %494 = vmatprep.subr.mxu0 0.0
  %495 = vmatpush1.msra.mxu0 %v456
  %496 = vmatprep.subr.mxu0 0.0
  %497 = vmatpush1.msra.mxu0 %v455
  %498 = vmatprep.subr.mxu0 0.0
  %499 = vmatpush1.msra.mxu0 %v454
  %500 = vmatprep.subr.mxu0 0.0
  %501 = vmatpush1.msra.mxu0 %v453
  %502 = vmatprep.subr.mxu0 0.0
  %503 = vmatpush1.msra.mxu0 %v452
  %504 = vmatprep.subr.mxu0 0.0
  %505 = vmatpush1.msra.mxu0 %v451
  %506 = vmatprep.subr.mxu0 0.0
  %507 = vmatpush1.msra.mxu0 %v450
  %508 = vmatprep.subr.mxu0 0.0
  %509 = vmatpush1.msra.mxu0 %v449
  %510 = vmatprep.subr.mxu0 0.0
  %511 = vmatpush1.msra.mxu0 %v448
  %512 = vmatprep.subr.mxu0 0.0
  %513 = vmatpush2.msra.mxu0 %v479
  %514 = vmatprep.subr.mxu0 0.0
  %515 = vmatpush2.msra.mxu0 %v478
  %516 = vmatprep.subr.mxu0 0.0
  %517 = vmatpush2.msra.mxu0 %v477
  %518 = vmatprep.subr.mxu0 0.0
  %519 = vmatpush2.msra.mxu0 %v476
  %520 = vmatprep.subr.mxu0 0.0
  %521 = vmatpush2.msra.mxu0 %v475
  %522 = vmatprep.subr.mxu0 0.0
  %523 = vmatpush2.msra.mxu0 %v474
  %524 = vmatprep.subr.mxu0 0.0
  %525 = vmatpush2.msra.mxu0 %v473
  %526 = vmatprep.subr.mxu0 0.0
  %527 = vmatpush2.msra.mxu0 %v472
  %528 = vmatprep.subr.mxu0 0.0
  %529 = vmatpush2.msra.mxu0 %v471
  %530 = vmatprep.subr.mxu0 0.0
  %531 = vmatpush2.msra.mxu0 %v470
  %532 = vmatprep.subr.mxu0 0.0
  %533 = vmatpush2.msra.mxu0 %v469
  %534 = vmatprep.subr.mxu0 0.0
  %535 = vmatpush2.msra.mxu0 %v468
  %536 = vmatprep.subr.mxu0 0.0
  %537 = vmatpush2.msra.mxu0 %v467
  %538 = vmatprep.subr.mxu0 0.0
  %539 = vmatpush2.msra.mxu0 %v466
  %540 = vmatprep.subr.mxu0 0.0
  %541 = vmatpush2.msra.mxu0 %v465
  %542 = vmatprep.subr.mxu0 0.0
  %543 = vmatpush2.msra.mxu0 %v464
  %544 = vmatprep.mubr.f32.mxu0 %v445
  %545 = vmatmul.mubr.f32.gmra.mxu0 %v444
  %v546 = vpop.f32.mrf.mxu0
  %v547 = vadd.f32 0.0, %v546
  %v548 = vpop.f32.mrf.mxu0
  %549 = vmatprep.mubr.f32.mxu0 %v447
  %550 = vmatmul.mubr.f32.gmra.mxu0 %v446
  %v551 = vpop.f32.mrf.mxu0
  %v552 = vadd.f32 0.0, %v551
  %v553 = vpop.f32.mrf.mxu0
  %554 = vdwg.mxu0
  %v555 = vmax.f32 %v547, 0.0
  %v556 = vmax.f32 %v552, 0.0
  %v557 = vsel %vm82, %v555, 0.0
  %v558 = vrot.slane %v557, 4
  %v559 = vadd.f32 %v557, %v558
  %v560 = vrot.slane %v559, 2
  %v561 = vadd.f32 %v559, %v560
  %v562 = vrot.slane %v561, 1
  %v563 = vadd.f32 %v561, %v562
  %v564 = vsel %vm82, %v556, 0.0
  %v565 = vrot.slane %v564, 4
  %v566 = vadd.f32 %v564, %v565
  %v567 = vrot.slane %v566, 2
  %v568 = vadd.f32 %v566, %v567
  %v569 = vrot.slane %v568, 1
  %v570 = vadd.f32 %v568, %v569
  %v571 = vrcp.pop 8.0
  %v572 = vmul.f32 %v563, %v571
  %v573 = vmul.f32 %v570, %v571
  %v574 = vld [vmem:[%s5] sm:$0xff]
  %v575 = vld [vmem:[%s5 + $0x8] sm:$0xff]
  %v576 = vld [vmem:[%s5 + $0x10] sm:$0xff]
  %v577 = vld [vmem:[%s5 + $0x18] sm:$0xff]
  %v578 = vld [vmem:[%s6] sm:$0x1]
  %v580 = vlaneseq
  %v581 = vshrl.u32 %v580, 7
  %v582 = vsub.s32 0, %v581
  %v583 = vrot.slane %v578, %v582
  %vm587 = vcmask 1041409
  %v588 = vsel %vm587, %v573, %v572
  %v589 = vsel %vm82, %v588, 0
  %591 = vmatprep.subr.mxu0 0.0
  %592 = vmatpush1.msra.mxu0 0.0
  %593 = vmatprep.subr.mxu0 0.0
  %594 = vmatpush1.msra.mxu0 0.0
  %595 = vmatprep.subr.mxu0 0.0
  %596 = vmatpush1.msra.mxu0 0.0
  %597 = vmatprep.subr.mxu0 0.0
  %598 = vmatpush1.msra.mxu0 0.0
  %599 = vmatprep.subr.mxu0 0.0
  %600 = vmatpush1.msra.mxu0 0.0
  %601 = vmatprep.subr.mxu0 0.0
  %602 = vmatpush1.msra.mxu0 0.0
  %603 = vmatprep.subr.mxu0 0.0
  %604 = vmatpush1.msra.mxu0 0.0
  %605 = vmatprep.subr.mxu0 0.0
  %606 = vmatpush1.msra.mxu0 0.0
  %607 = vmatprep.subr.mxu0 0.0
  %608 = vmatpush1.msra.mxu0 0.0
  %609 = vmatprep.subr.mxu0 0.0
  %610 = vmatpush1.msra.mxu0 0.0
  %611 = vmatprep.subr.mxu0 0.0
  %612 = vmatpush1.msra.mxu0 0.0
  %613 = vmatprep.subr.mxu0 0.0
  %614 = vmatpush1.msra.mxu0 0.0
  %615 = vmatprep.subr.mxu0 0.0
  %616 = vmatpush1.msra.mxu0 %v577
  %617 = vmatprep.subr.mxu0 0.0
  %618 = vmatpush1.msra.mxu0 %v576
  %619 = vmatprep.subr.mxu0 0.0
  %620 = vmatpush1.msra.mxu0 %v575
  %621 = vmatprep.subr.mxu0 0.0
  %622 = vmatpush1.msra.mxu0 %v574
  %623 = vmatprep.subr.mxu0 0.0
  %624 = vmatpush2.msra.mxu0 0.0
  %625 = vmatprep.subr.mxu0 0.0
  %626 = vmatpush2.msra.mxu0 0.0
  %627 = vmatprep.subr.mxu0 0.0
  %628 = vmatpush2.msra.mxu0 0.0
  %629 = vmatprep.subr.mxu0 0.0
  %630 = vmatpush2.msra.mxu0 0.0
  %631 = vmatprep.subr.mxu0 0.0
  %632 = vmatpush2.msra.mxu0 0.0
  %633 = vmatprep.subr.mxu0 0.0
  %634 = vmatpush2.msra.mxu0 0.0
  %635 = vmatprep.subr.mxu0 0.0
  %636 = vmatpush2.msra.mxu0 0.0
  %637 = vmatprep.subr.mxu0 0.0
  %638 = vmatpush2.msra.mxu0 0.0
  %639 = vmatprep.subr.mxu0 0.0
  %640 = vmatpush2.msra.mxu0 0.0
  %641 = vmatprep.subr.mxu0 0.0
  %642 = vmatpush2.msra.mxu0 0.0
  %643 = vmatprep.subr.mxu0 0.0
  %644 = vmatpush2.msra.mxu0 0.0
  %645 = vmatprep.subr.mxu0 0.0
  %646 = vmatpush2.msra.mxu0 0.0
  %647 = vmatprep.subr.mxu0 0.0
  %648 = vmatpush2.msra.mxu0 0.0
  %649 = vmatprep.subr.mxu0 0.0
  %650 = vmatpush2.msra.mxu0 0.0
  %651 = vmatprep.subr.mxu0 0.0
  %652 = vmatpush2.msra.mxu0 0.0
  %653 = vmatprep.subr.mxu0 0.0
  %654 = vmatpush2.msra.mxu0 0.0
  %655 = vmatprep.mubr.f32.mxu0 0.0
  %656 = vmatmul.mubr.f32.gmra.mxu0 %v589
  %v657 = vpop.f32.mrf.mxu0
  %v658 = vadd.f32 %v583, %v657
  %v659 = vpop.f32.mrf.mxu0
  %660 = vdwg.mxu0
  %vm661 = vcmask 58368
  %662 = vst.msk [vmem:[%s7] sm:$0x3] %vm661, %v658
  // Predicated region
  $region30: #{attn_temporal_gnn.1} parent=0 // pred_check
    _
  $region31: #{attn_temporal_gnn.1} parent=0 // pred_check_branch
    %664 = sbr.rel (0) target = $region33
  $region32: #{attn_temporal_gnn.1} parent=0 // pred_region
    _
  $region33: #{attn_temporal_gnn.1} parent=0 // pred_fallthru
    _
  // Predicated region
  $region34: #{attn_temporal_gnn.1} parent=0 // pred_check
    _
  $region35: #{attn_temporal_gnn.1} parent=0 // pred_check_branch
    %666 = sbr.rel (0) target = $region37
  $region36: #{attn_temporal_gnn.1} parent=0 // pred_region
    _
  $region37: #{attn_temporal_gnn.1} parent=0 // pred_fallthru
    _

</llo_original>
